<compile_context>
chip_gen: v7x
topology: tpu7x:2x2x1
jax: 0.10.0
libtpu: 0.0.40
codegen_flags: <defaults>
</compile_context>

<pallas_src>
import functools

import jax
import jax.numpy as jnp
from jax.experimental import pallas as pl
from jax.experimental.pallas import tpu as pltpu


def _mlp_kernel(x_ref, w1_ref, b1_ref, w2_ref, b2_ref, w3_ref, o_ref):
    wdt = w1_ref.dtype  # matmul operand dtype (f32 or bf16); accumulation is f32
    # hidden layer 1: Linear(size -> size) + ReLU   (bias/ReLU in f32)
    h = jnp.dot(x_ref[...], w1_ref[...], preferred_element_type=jnp.float32)
    h = jnp.maximum(h + b1_ref[...], 0.0)
    # hidden layer 2: Linear(size -> size) + ReLU
    h = jnp.dot(h.astype(wdt), w2_ref[...], preferred_element_type=jnp.float32)
    h = jnp.maximum(h + b2_ref[...], 0.0)
    # output layer: Linear(size -> padded output_size), bias=False, no activation
    out = jnp.dot(h.astype(wdt), w3_ref[...], preferred_element_type=jnp.float32)
    o_ref[...] = out.astype(o_ref.dtype)


def _round_up(x, m):
    return ((x + m - 1) // m) * m


@functools.partial(jax.jit, static_argnames=("block_m", "compute_dtype"))
def mlp_forward(x, w1, b1, w2, b2, w3, *, block_m=256, compute_dtype=None):
    """x: (B, size); w1,w2: (size, size); b1,b2: (1, size); w3: (size, output_size).

    compute_dtype=jnp.bfloat16 casts x and the weights (not biases) for the
    MXU matmuls; accumulation stays f32.
    """
    out_dtype = x.dtype
    B, size = x.shape
    out_size = w3.shape[1]

    # Optional low-precision matmul operands (v6e/v7x MXU peak is bf16).
    if compute_dtype is not None:
        x = x.astype(compute_dtype)
        w1 = w1.astype(compute_dtype)
        w2 = w2.astype(compute_dtype)
        w3 = w3.astype(compute_dtype)
    b1 = b1.astype(jnp.float32)
    b2 = b2.astype(jnp.float32)

    # Lane-dense output: pad output columns to a multiple of 128.
    N = _round_up(out_size, 128)
    if N != out_size:
        w3 = jnp.pad(w3, ((0, 0), (0, N - out_size)))

    # Batch tile: as large as possible up to block_m, rounded to the sublane
    # granularity of the matmul dtype (8 for f32, 16 for bf16); pad B to a
    # multiple of the tile so the grid is exact.
    sub = 16 if x.dtype == jnp.bfloat16 else 8
    bm = max(sub, _round_up(min(block_m, B), sub))
    Bp = _round_up(B, bm)
    if Bp != B:
        x = jnp.pad(x, ((0, Bp - B), (0, 0)))
    grid = (Bp // bm,)  # "parallel" -> shards across v7x's two TensorCores when >1 step

    full = lambda i: (0, 0)          # weights/biases: same (whole) block every step
    resident = pl.Buffered(1)        # constant block index -> single buffer, no double-buffer waste

    x_item = x.dtype.itemsize
    o_item = jnp.dtype(out_dtype).itemsize
    weight_bytes = (w1.size * w1.dtype.itemsize + w2.size * w2.dtype.itemsize
                    + w3.size * w3.dtype.itemsize + (b1.size + b2.size) * 4)
    flops = 2 * Bp * size * (size + size + N)
    bytes_accessed = Bp * size * x_item + weight_bytes + Bp * N * o_item
    cost = pl.CostEstimate(flops=flops, transcendentals=0,
                           bytes_accessed=bytes_accessed)

    # Explicit scoped-VMEM budget: 2x-buffered x/out tiles + 1x-buffered weights,
    # with headroom; capped so it stays within v7x's 64 MiB physical VMEM.
    vmem_need = 2 * bm * size * x_item + 2 * bm * N * o_item + weight_bytes
    vmem_limit = int(min(64 * 1024 * 1024, max(2 * vmem_need, 16 * 1024 * 1024)))

    out = pl.pallas_call(
        _mlp_kernel,
        out_shape=jax.ShapeDtypeStruct((Bp, N), out_dtype),
        grid_spec=pltpu.PrefetchScalarGridSpec(
            num_scalar_prefetch=0,
            grid=grid,
            in_specs=[
                pl.BlockSpec((bm, size), lambda i: (i, 0)),                 # x tile (double-buffered)
                pl.BlockSpec((size, size), full, pipeline_mode=resident),   # w1
                pl.BlockSpec((1, size), full, pipeline_mode=resident),      # b1
                pl.BlockSpec((size, size), full, pipeline_mode=resident),   # w2
                pl.BlockSpec((1, size), full, pipeline_mode=resident),      # b2
                pl.BlockSpec((size, N), full, pipeline_mode=resident),      # w3 (lane-padded)
            ],
            out_specs=pl.BlockSpec((bm, N), lambda i: (i, 0)),
        ),
        compiler_params=pltpu.CompilerParams(
            dimension_semantics=("parallel",),
            vmem_limit_bytes=vmem_limit,
        ),
        cost_estimate=cost,
    )(x, w1, b1, w2, b2, w3)

    # Strip batch padding and output-lane padding.
    return out[:B, :out_size]


def init_mlp_params(key, size, output_size, dtype=jnp.float32):
    """Synthetic init mimicking nn.Linear's uniform(-1/sqrt(in), 1/sqrt(in)).

    PyTorch stores weight as (out, in); we return the (in, out) transpose so
    the kernel can compute x @ W directly.
    """
    k1, k2, k3, k4, k5 = jax.random.split(key, 5)
    bound = 1.0 / jnp.sqrt(jnp.float32(size))
    w1 = jax.random.uniform(k1, (size, size), dtype, -bound, bound)          # layer 0 weight^T
    b1 = jax.random.uniform(k2, (1, size), dtype, -bound, bound)             # layer 0 bias
    w2 = jax.random.uniform(k3, (size, size), dtype, -bound, bound)          # layer 1 weight^T
    b2 = jax.random.uniform(k4, (1, size), dtype, -bound, bound)             # layer 1 bias
    w3 = jax.random.uniform(k5, (size, output_size), dtype, -bound, bound)   # output weight^T (bias=False)
    return w1, b1, w2, b2, w3


def mlp_reference(x, w1, b1, w2, b2, w3):
    h = jnp.maximum(x @ w1 + b1, 0.0)
    h = jnp.maximum(h @ w2 + b2, 0.0)
    return h @ w3


if __name__ == "__main__":
    # Small shapes consistent with MLP(output_size, n_layers=2, size=...).
    # Batch large enough that the grid has >1 parallel step (occupies both
    # TensorCores on v7x) and the big batch tile actually amortizes overhead.
    size = 128
    output_size = 64          # exercises the lane-padding (64 -> 128) path
    batch = 512

    key = jax.random.PRNGKey(0)
    kx, kp = jax.random.split(key)
    x = jax.random.normal(kx, (batch, size), jnp.float32)
    params = init_mlp_params(kp, size, output_size)

    ref = mlp_reference(x, *params)

    # 1) f32 path: exact semantics of the PyTorch module.
    out = jax.block_until_ready(mlp_forward(x, *params, block_m=256))
    assert out.shape == (batch, output_size)
    assert jnp.allclose(out, ref, atol=1e-4, rtol=1e-4), "f32 mismatch vs reference"

    # 2) Small / ragged batch: wrapper pads the batch tile internally.
    out_small = jax.block_until_ready(mlp_forward(x[:10], *params, block_m=256))
    assert jnp.allclose(out_small, ref[:10], atol=1e-4, rtol=1e-4), "small-batch mismatch"

    # 3) bf16 matmul path (v6e/v7x): looser tolerance due to bf16 operands.
    out_bf16 = jax.block_until_ready(
        mlp_forward(x, *params, block_m=256, compute_dtype=jnp.bfloat16))
    assert jnp.allclose(out_bf16, ref, atol=1e-1, rtol=1e-1), "bf16 mismatch vs reference"

    print("KERNEL_OK")
</pallas_src>

<mosaic_0001>
module attributes {stable_mosaic.version = 11 : i64} {
  func.func @_mlp_kernel(%arg0: i32, %arg1: memref<256x128xf32, #tpu.memory_space<vmem>>, %arg2: memref<128x128xf32, #tpu.memory_space<vmem>>, %arg3: memref<1x128xf32, #tpu.memory_space<vmem>>, %arg4: memref<128x128xf32, #tpu.memory_space<vmem>>, %arg5: memref<1x128xf32, #tpu.memory_space<vmem>>, %arg6: memref<128x128xf32, #tpu.memory_space<vmem>>, %arg7: memref<256x128xf32, #tpu.memory_space<vmem>>) attributes {dimension_semantics = [#tpu.dimension_semantics<parallel>], iteration_bounds = array<i64: 2>, scalar_prefetch = 0 : i64, scratch_operands = 0 : i64, tpu.core_type = #tpu.core_type<tc>, window_params = [{transform_indices = @transform_0, window_bounds = array<i64: 256, 128>}, {pipeline_mode = #tpu.pipeline_mode<synchronous>, transform_indices = @transform_1, window_bounds = array<i64: 128, 128>}, {pipeline_mode = #tpu.pipeline_mode<synchronous>, transform_indices = @transform_2, window_bounds = array<i64: 1, 128>}, {pipeline_mode = #tpu.pipeline_mode<synchronous>, transform_indices = @transform_3, window_bounds = array<i64: 128, 128>}, {pipeline_mode = #tpu.pipeline_mode<synchronous>, transform_indices = @transform_4, window_bounds = array<i64: 1, 128>}, {pipeline_mode = #tpu.pipeline_mode<synchronous>, transform_indices = @transform_5, window_bounds = array<i64: 128, 128>}, {transform_indices = @transform_6, window_bounds = array<i64: 256, 128>}]} {
    %c0 = arith.constant 0 : index
    %c0_0 = arith.constant 0 : index
    %0 = vector.load %arg1[%c0, %c0_0] : memref<256x128xf32, #tpu.memory_space<vmem>>, vector<256x128xf32>
    %c0_1 = arith.constant 0 : index
    %c0_2 = arith.constant 0 : index
    %1 = vector.load %arg2[%c0_1, %c0_2] : memref<128x128xf32, #tpu.memory_space<vmem>>, vector<128x128xf32>
    %cst = arith.constant dense<0.000000e+00> : vector<256x128xf32>
    %2 = tpu.matmul %0, %1, %cst {dimension_numbers = #tpu.dot_dimension_numbers<[1], [0], [0], [1], [0, 0, 1, 1], [], []>} : vector<256x128xf32>, vector<128x128xf32>, vector<256x128xf32> -> vector<256x128xf32>
    %c0_3 = arith.constant 0 : index
    %c0_4 = arith.constant 0 : index
    %3 = vector.load %arg3[%c0_3, %c0_4] : memref<1x128xf32, #tpu.memory_space<vmem>>, vector<1x128xf32>
    %4 = vector.broadcast %3 : vector<1x128xf32> to vector<256x128xf32>
    %5 = arith.addf %2, %4 : vector<256x128xf32>
    %cst_5 = arith.constant 0.000000e+00 : f32
    %6 = vector.broadcast %cst_5 : f32 to vector<256x128xf32>
    %7 = arith.maximumf %5, %6 : vector<256x128xf32>
    %c0_6 = arith.constant 0 : index
    %c0_7 = arith.constant 0 : index
    %8 = vector.load %arg4[%c0_6, %c0_7] : memref<128x128xf32, #tpu.memory_space<vmem>>, vector<128x128xf32>
    %cst_8 = arith.constant dense<0.000000e+00> : vector<256x128xf32>
    %9 = tpu.matmul %7, %8, %cst_8 {dimension_numbers = #tpu.dot_dimension_numbers<[1], [0], [0], [1], [0, 0, 1, 1], [], []>} : vector<256x128xf32>, vector<128x128xf32>, vector<256x128xf32> -> vector<256x128xf32>
    %c0_9 = arith.constant 0 : index
    %c0_10 = arith.constant 0 : index
    %10 = vector.load %arg5[%c0_9, %c0_10] : memref<1x128xf32, #tpu.memory_space<vmem>>, vector<1x128xf32>
    %11 = vector.broadcast %10 : vector<1x128xf32> to vector<256x128xf32>
    %12 = arith.addf %9, %11 : vector<256x128xf32>
    %cst_11 = arith.constant 0.000000e+00 : f32
    %13 = vector.broadcast %cst_11 : f32 to vector<256x128xf32>
    %14 = arith.maximumf %12, %13 : vector<256x128xf32>
    %c0_12 = arith.constant 0 : index
    %c0_13 = arith.constant 0 : index
    %15 = vector.load %arg6[%c0_12, %c0_13] : memref<128x128xf32, #tpu.memory_space<vmem>>, vector<128x128xf32>
    %cst_14 = arith.constant dense<0.000000e+00> : vector<256x128xf32>
    %16 = tpu.matmul %14, %15, %cst_14 {dimension_numbers = #tpu.dot_dimension_numbers<[1], [0], [0], [1], [0, 0, 1, 1], [], []>} : vector<256x128xf32>, vector<128x128xf32>, vector<256x128xf32> -> vector<256x128xf32>
    %c0_15 = arith.constant 0 : index
    %c0_16 = arith.constant 0 : index
    %17 = vector.load %arg7[%c0_15, %c0_16] : memref<256x128xf32, #tpu.memory_space<vmem>>, vector<256x128xf32>
    tpu.vector_store %arg7[%c0_15, %c0_16], %16 {strides = array<i32>} : memref<256x128xf32, #tpu.memory_space<vmem>>, vector<256x128xf32>,
    return
  }
  func.func @transform_0(%arg0: i32) -> (i32, i32) {
    %c0_i32 = arith.constant 0 : i32
    %c0_i32_0 = arith.constant 0 : i32
    return %arg0, %c0_i32 : i32, i32
  }
  func.func @transform_1(%arg0: i32) -> (i32, i32) {
    %c0_i32 = arith.constant 0 : i32
    %c0_i32_0 = arith.constant 0 : i32
    %c0_i32_1 = arith.constant 0 : i32
    return %c0_i32, %c0_i32_0 : i32, i32
  }
  func.func @transform_2(%arg0: i32) -> (i32, i32) {
    %c0_i32 = arith.constant 0 : i32
    %c0_i32_0 = arith.constant 0 : i32
    %c0_i32_1 = arith.constant 0 : i32
    return %c0_i32, %c0_i32_0 : i32, i32
  }
  func.func @transform_3(%arg0: i32) -> (i32, i32) {
    %c0_i32 = arith.constant 0 : i32
    %c0_i32_0 = arith.constant 0 : i32
    %c0_i32_1 = arith.constant 0 : i32
    return %c0_i32, %c0_i32_0 : i32, i32
  }
  func.func @transform_4(%arg0: i32) -> (i32, i32) {
    %c0_i32 = arith.constant 0 : i32
    %c0_i32_0 = arith.constant 0 : i32
    %c0_i32_1 = arith.constant 0 : i32
    return %c0_i32, %c0_i32_0 : i32, i32
  }
  func.func @transform_5(%arg0: i32) -> (i32, i32) {
    %c0_i32 = arith.constant 0 : i32
    %c0_i32_0 = arith.constant 0 : i32
    %c0_i32_1 = arith.constant 0 : i32
    return %c0_i32, %c0_i32_0 : i32, i32
  }
  func.func @transform_6(%arg0: i32) -> (i32, i32) {
    %c0_i32 = arith.constant 0 : i32
    %c0_i32_0 = arith.constant 0 : i32
    return %arg0, %c0_i32 : i32, i32
  }
}

</mosaic_0001>

<llo_original>
// kernel: mlp_forward.1
$region0: #{mlp_forward.1}
  #allocation0 [shape = 'u32[]', space=smem, size = 0x4, offset = 0x4, fixed_abs, tag = 'smem constant byte address 0x4 - core index']
  #allocation1 [shape = 'u32[144,128]{1,0:T(1,128)}', space=vmem, size = 0x12000, scoped, tag = 'internal scratch']
  %s0 = inlined_call_operand.hbm [shape: f32[512,128], index: 0, kind: input, shape index: {}]
  %s1 = inlined_call_operand.vmem [shape: f32[128,128], index: 1, kind: input, shape index: {}]
  %s2 = inlined_call_operand.vmem [shape: f32[1,128], index: 2, kind: input, shape index: {}]
  %s3 = inlined_call_operand.vmem [shape: f32[128,128], index: 3, kind: input, shape index: {}]
  %s4 = inlined_call_operand.vmem [shape: f32[1,128], index: 4, kind: input, shape index: {}]
  %s5 = inlined_call_operand.vmem [shape: f32[128,128], index: 5, kind: input, shape index: {}]
  %s6 = inlined_call_operand.vmem [shape: f32[512,128], index: 6, kind: output, shape index: {}]
  %s7 = sld [smem:[#allocation0]]
  $region61: #{mlp_forward.1} parent=0
    _
  %s9 = ssub.s32 1, %s7
  %s10 = scalar_select 0, %s9, %s7
  $region1: #{mlp_forward.1} parent=0
    #allocation2 [shape = 'u8[262144]{0}', space=vmem, size = 0x40000, scoped, tag = 'input window, operand 0']
    #allocation3 [shape = 's32[2]{0}', space=sflag, size = 0x8, scoped, tag = 'scoped memory for mlp_forward.1']
    %11 = vsyncpa [#allocation3], 0
    %s12 = scalar_lea.sflag [#allocation3], 1
    %13 = vsyncpa %s12, 0
    loop: start=0, step=1, limit=4
    $region2: #{mlp_forward.1} parent=1 // loop_pre_header
      _
    $region3: #{mlp_forward.1} parent=1 // loop_header
      %s15 = sphi 0, %s19
      %p16 = scmp.ge.s32.totalorder %s15, 4
      %s25 = sphi 0, %s27
      %s28 = sphi 0, %s25
      %s29 = sphi 0, %s28
      %s45 = sphi 0, %s29
      %s49 = sphi 0, %s49
      %s51 = sphi 0, %s49
      %s52 = sphi 0, %s51
      %s66 = sphi 0, %s52
      %s70 = sphi 0, %s70
      %s72 = sphi 0, %s70
      %s73 = sphi 0, %s72
      %s87 = sphi 0, %s73
      %s91 = sphi 0, %s91
      %s93 = sphi 0, %s91
      %s94 = sphi 0, %s93
      %s108 = sphi 0, %s94
      %s112 = sphi 0, %s112
      %s114 = sphi 0, %s112
      %s115 = sphi 0, %s114
      %s129 = sphi 0, %s115
      %s133 = sphi 0, %s133
      %s135 = sphi 0, %s133
      %s136 = sphi 0, %s135
      %s150 = sphi 0, %s136
      %s156 = sphi 0, %s158
      %s159 = sphi 0, %s156
      %s160 = sphi 0, %s159
      %s176 = sphi 0, %s160
    $region4: #{mlp_forward.1} parent=1 // loop_header_branch
      %18 = sbr.rel (%p16) target = $region8
    $region5: #{mlp_forward.1} parent=1 // loop_body
      %s20 = ssub.s32 %s15, 1
      %s21 = ssub.s32 %s15, 2
      %s22 = sadd.s32 %s15, 1
      %s23 = ssub.s32 %s15, %s22
      %p24 = scmp.eq.s32.totalorder %s23, 0
      %s26 = sadd.s32 %s25, 1
      %s27 = scalar_select %p24, %s25, %s26
      %p30 = pneg %p24
      %p31 = scmp.eq.s32.totalorder %s15, 1
      %p32 = por %p30, %p31
      %p33 = scmp.ne.s32.totalorder %s25, %s28
      %p34 = scmp.eq.s32.totalorder %s15, 0
      %p35 = por %p33, %p34
      %p36 = scmp.ne.s32.totalorder %s25, %s28
      %p37 = scmp.eq.s32.totalorder %s20, 1
      %p38 = por %p36, %p37
      %p39 = scmp.ne.s32.totalorder %s28, %s29
      %p40 = scmp.eq.s32.totalorder %s20, 0
      %p41 = por %p39, %p40
      %p42 = scmp.ne.s32.totalorder %s28, %s29
      %p43 = scmp.eq.s32.totalorder %s21, 1
      %p44 = por %p42, %p43
      %p46 = scmp.ne.s32.totalorder %s29, %s45
      %p47 = scmp.eq.s32.totalorder %s21, 0
      %p48 = por %p46, %p47
      %s50 = sadd.s32 %s49, 1
      %p53 = scmp.eq.s32.totalorder %s15, 1
      %p54 = scmp.ne.s32.totalorder %s49, %s51
      %p55 = scmp.eq.s32.totalorder %s15, 0
      %p56 = por %p54, %p55
      %p57 = scmp.ne.s32.totalorder %s49, %s51
      %p58 = scmp.eq.s32.totalorder %s20, 1
      %p59 = por %p57, %p58
      %p60 = scmp.ne.s32.totalorder %s51, %s52
      %p61 = scmp.eq.s32.totalorder %s20, 0
      %p62 = por %p60, %p61
      %p63 = scmp.ne.s32.totalorder %s51, %s52
      %p64 = scmp.eq.s32.totalorder %s21, 1
      %p65 = por %p63, %p64
      %p67 = scmp.ne.s32.totalorder %s52, %s66
      %p68 = scmp.eq.s32.totalorder %s21, 0
      %p69 = por %p67, %p68
      %s71 = sadd.s32 %s70, 1
      %p74 = scmp.eq.s32.totalorder %s15, 1
      %p75 = scmp.ne.s32.totalorder %s70, %s72
      %p76 = scmp.eq.s32.totalorder %s15, 0
      %p77 = por %p75, %p76
      %p78 = scmp.ne.s32.totalorder %s70, %s72
      %p79 = scmp.eq.s32.totalorder %s20, 1
      %p80 = por %p78, %p79
      %p81 = scmp.ne.s32.totalorder %s72, %s73
      %p82 = scmp.eq.s32.totalorder %s20, 0
      %p83 = por %p81, %p82
      %p84 = scmp.ne.s32.totalorder %s72, %s73
      %p85 = scmp.eq.s32.totalorder %s21, 1
      %p86 = por %p84, %p85
      %p88 = scmp.ne.s32.totalorder %s73, %s87
      %p89 = scmp.eq.s32.totalorder %s21, 0
      %p90 = por %p88, %p89
      %s92 = sadd.s32 %s91, 1
      %p95 = scmp.eq.s32.totalorder %s15, 1
      %p96 = scmp.ne.s32.totalorder %s91, %s93
      %p97 = scmp.eq.s32.totalorder %s15, 0
      %p98 = por %p96, %p97
      %p99 = scmp.ne.s32.totalorder %s91, %s93
      %p100 = scmp.eq.s32.totalorder %s20, 1
      %p101 = por %p99, %p100
      %p102 = scmp.ne.s32.totalorder %s93, %s94
      %p103 = scmp.eq.s32.totalorder %s20, 0
      %p104 = por %p102, %p103
      %p105 = scmp.ne.s32.totalorder %s93, %s94
      %p106 = scmp.eq.s32.totalorder %s21, 1
      %p107 = por %p105, %p106
      %p109 = scmp.ne.s32.totalorder %s94, %s108
      %p110 = scmp.eq.s32.totalorder %s21, 0
      %p111 = por %p109, %p110
      %s113 = sadd.s32 %s112, 1
      %p116 = scmp.eq.s32.totalorder %s15, 1
      %p117 = scmp.ne.s32.totalorder %s112, %s114
      %p118 = scmp.eq.s32.totalorder %s15, 0
      %p119 = por %p117, %p118
      %p120 = scmp.ne.s32.totalorder %s112, %s114
      %p121 = scmp.eq.s32.totalorder %s20, 1
      %p122 = por %p120, %p121
      %p123 = scmp.ne.s32.totalorder %s114, %s115
      %p124 = scmp.eq.s32.totalorder %s20, 0
      %p125 = por %p123, %p124
      %p126 = scmp.ne.s32.totalorder %s114, %s115
      %p127 = scmp.eq.s32.totalorder %s21, 1
      %p128 = por %p126, %p127
      %p130 = scmp.ne.s32.totalorder %s115, %s129
      %p131 = scmp.eq.s32.totalorder %s21, 0
      %p132 = por %p130, %p131
      %s134 = sadd.s32 %s133, 1
      %p137 = scmp.eq.s32.totalorder %s15, 1
      %p138 = scmp.ne.s32.totalorder %s133, %s135
      %p139 = scmp.eq.s32.totalorder %s15, 0
      %p140 = por %p138, %p139
      %p141 = scmp.ne.s32.totalorder %s133, %s135
      %p142 = scmp.eq.s32.totalorder %s20, 1
      %p143 = por %p141, %p142
      %p144 = scmp.ne.s32.totalorder %s135, %s136
      %p145 = scmp.eq.s32.totalorder %s20, 0
      %p146 = por %p144, %p145
      %p147 = scmp.ne.s32.totalorder %s135, %s136
      %p148 = scmp.eq.s32.totalorder %s21, 1
      %p149 = por %p147, %p148
      %p151 = scmp.ne.s32.totalorder %s136, %s150
      %p152 = scmp.eq.s32.totalorder %s21, 0
      %p153 = por %p151, %p152
      %s154 = ssub.s32 %s15, %s22
      %p155 = scmp.eq.s32.totalorder %s154, 0
      %s157 = sadd.s32 %s156, 1
      %s158 = scalar_select %p155, %s156, %s157
      %p161 = pneg %p155
      %p162 = scmp.eq.s32.totalorder %s15, 1
      %p163 = por %p161, %p162
      %p164 = scmp.ne.s32.totalorder %s156, %s159
      %p165 = scmp.eq.s32.totalorder %s15, 0
      %p166 = por %p164, %p165
      %p167 = scmp.ne.s32.totalorder %s156, %s159
      %p168 = scmp.eq.s32.totalorder %s20, 1
      %p169 = por %p167, %p168
      %p170 = scmp.ne.s32.totalorder %s159, %s160
      %p171 = scmp.eq.s32.totalorder %s20, 0
      %p172 = por %p170, %p171
      %p173 = scmp.ne.s32.totalorder %s159, %s160
      %p174 = scmp.eq.s32.totalorder %s21, 1
      %p175 = por %p173, %p174
      %p177 = scmp.ne.s32.totalorder %s160, %s176
      %p178 = scmp.eq.s32.totalorder %s21, 0
      %p179 = por %p177, %p178
      %p180 = scmp.le.s32.totalorder 1, %s15
      %p181 = scmp.lt.s32.totalorder %s15, 3
      %p182 = pnand %p180, %p181
      %p183 = pneg %p182
      // Predicated region
      $region9: #{mlp_forward.1} parent=5 // pred_check
        _
      $region10: #{mlp_forward.1} parent=5 // pred_check_branch
        %185 = sbr.rel (%p182) target = $region12
      $region11: #{mlp_forward.1} parent=5 // pred_region
        %s186 = ssub.s32 %s15, 1
        // Predicated region
        $region13: #{mlp_forward.1} parent=11 // pred_check
          %p187 = pneg %p62
        $region14: #{mlp_forward.1} parent=11 // pred_check_branch
          %189 = sbr.rel (%p187) target = $region16
        $region15: #{mlp_forward.1} parent=11 // pred_region
          _
        $region16: #{mlp_forward.1} parent=11 // pred_fallthru
          _
        // Predicated region
        $region17: #{mlp_forward.1} parent=11 // pred_check
          %p190 = pneg %p83
        $region18: #{mlp_forward.1} parent=11 // pred_check_branch
          %192 = sbr.rel (%p190) target = $region20
        $region19: #{mlp_forward.1} parent=11 // pred_region
          _
        $region20: #{mlp_forward.1} parent=11 // pred_fallthru
          _
        // Predicated region
        $region21: #{mlp_forward.1} parent=11 // pred_check
          %p193 = pneg %p104
        $region22: #{mlp_forward.1} parent=11 // pred_check_branch
          %195 = sbr.rel (%p193) target = $region24
        $region23: #{mlp_forward.1} parent=11 // pred_region
          _
        $region24: #{mlp_forward.1} parent=11 // pred_fallthru
          _
        // Predicated region
        $region25: #{mlp_forward.1} parent=11 // pred_check
          %p196 = pneg %p125
        $region26: #{mlp_forward.1} parent=11 // pred_check_branch
          %198 = sbr.rel (%p196) target = $region28
        $region27: #{mlp_forward.1} parent=11 // pred_region
          _
        $region28: #{mlp_forward.1} parent=11 // pred_fallthru
          _
        // Predicated region
        $region29: #{mlp_forward.1} parent=11 // pred_check
          %p199 = pneg %p146
        $region30: #{mlp_forward.1} parent=11 // pred_check_branch
          %201 = sbr.rel (%p199) target = $region32
        $region31: #{mlp_forward.1} parent=11 // pred_region
          _
        $region32: #{mlp_forward.1} parent=11 // pred_fallthru
          _
      $region12: #{mlp_forward.1} parent=5 // pred_fallthru
        _
      %p202 = scmp.lt.s32.totalorder %s15, 2
      // Predicated region
      $region33: #{mlp_forward.1} parent=5 // pred_check
        %p203 = pneg %p202
      $region34: #{mlp_forward.1} parent=5 // pred_check_branch
        %205 = sbr.rel (%p203) target = $region36
      $region35: #{mlp_forward.1} parent=5 // pred_region
        // Predicated region
        $region37: #{mlp_forward.1} parent=35 // pred_check
          %p206 = pneg %p35
        $region38: #{mlp_forward.1} parent=35 // pred_check_branch
          %208 = sbr.rel (%p206) target = $region40
        $region39: #{mlp_forward.1} parent=35 // pred_region
          %s209 = sand.u32 %s25, 1
          %s210 = scalar_lea.sflag [#allocation3], %s209
          %s211 = sand.u32 %s25, 1
          %s212 = smul.addr %s211, 256
          %s213 = scalar_lea.vmem [#allocation2], %s212
          %s214 = smul.u32 32, %s15
          %s216 = ssub.s32 4096, 4096
          %217 = vsyncadd %s210, %s216
          %s218 = smul.addr %s214, 128
          %s219 = scalar_lea.hbm %s0, %s218
          %s220 = sshll.u32 %s213, 4
          %s221 = int_to_ptr.vmem [resolvable:$true] %s220
          %226 = dma.hbm_to_vmem [thread:$0]  %s219, 4096, %s221, %s210, 128, 128, 8
        $region40: #{mlp_forward.1} parent=35 // pred_fallthru
          _
      $region36: #{mlp_forward.1} parent=5 // pred_fallthru
        _
      %p227 = scmp.le.s32.totalorder 1, %s15
      %p228 = scmp.lt.s32.totalorder %s15, 3
      %p229 = pnand %p227, %p228
      %p230 = pneg %p229
      // Predicated region
      $region41: #{mlp_forward.1} parent=5 // pred_check
        _
      $region42: #{mlp_forward.1} parent=5 // pred_check_branch
        %232 = sbr.rel (%p229) target = $region44
      $region43: #{mlp_forward.1} parent=5 // pred_region
        %s233 = ssub.s32 %s15, 1
        %s234 = sand.u32 %s28, 1
        %s235 = scalar_lea.sflag [#allocation3], %s234
        %s236 = sand.u32 %s28, 1
        %s237 = smul.addr %s236, 256
        %s238 = scalar_lea.vmem [#allocation2], %s237
        // Predicated region
        $region45: #{mlp_forward.1} parent=43 // pred_check
          %p239 = pneg %p41
        $region46: #{mlp_forward.1} parent=43 // pred_check_branch
          %241 = sbr.rel (%p239) target = $region48
        $region47: #{mlp_forward.1} parent=43 // pred_region
          %242 = dma.done %s235, 4096
        $region48: #{mlp_forward.1} parent=43 // pred_fallthru
          _
        %s243 = sand.u32 %s28, 1
        %s244 = scalar_lea.sflag [#allocation3], %s243
        %s245 = sand.u32 %s28, 1
        %s246 = smul.addr %s245, 256
        %s247 = scalar_lea.vmem [#allocation2], %s246
        %p248 = pneg %p41
        %p249 = pneg %p38
        %p250 = pneg %p62
        %p251 = pneg %p59
        %p252 = pneg %p83
        %p253 = pneg %p80
        %p254 = pneg %p104
        %p255 = pneg %p101
        %p256 = pneg %p125
        %p257 = pneg %p122
        %p258 = pneg %p146
        %p259 = pneg %p143
        %p260 = pneg %p172
        %p261 = pneg %p169
        %s262 = smul.u32 32, %s20
        %p263 = scmp.lt.s32.totalorder %s262, 63
        %s264 = scalar_select %p263, %s262, 63
        %s265 = smul.addr %s264, 8
        %s266 = scalar_lea.vmem %s6, %s265
        %s267 = smul.u32 32, %s20
        %s268 = smul.u32 32, %s20
        %p269 = scmp.lt.s32.totalorder %s268, 63
        %s270 = scalar_select %p269, %s268, 63
        %s271 = smul.addr %s270, 8
        %s272 = scalar_lea.vmem %s6, %s271
        %s273 = smul.u32 32, %s20
        %v274 = vld [vmem:[%s238] sm:$0xff]
        %v275 = vld [vmem:[%s238 + $0x8] sm:$0xff]
        %v276 = vld [vmem:[%s238 + $0x10] sm:$0xff]
        %v277 = vld [vmem:[%s238 + $0x18] sm:$0xff]
        %v278 = vld [vmem:[%s238 + $0x20] sm:$0xff]
        %v279 = vld [vmem:[%s238 + $0x28] sm:$0xff]
        %v280 = vld [vmem:[%s238 + $0x30] sm:$0xff]
        %v281 = vld [vmem:[%s238 + $0x38] sm:$0xff]
        %v282 = vld [vmem:[%s238 + $0x40] sm:$0xff]
        %v283 = vld [vmem:[%s238 + $0x48] sm:$0xff]
        %v284 = vld [vmem:[%s238 + $0x50] sm:$0xff]
        %v285 = vld [vmem:[%s238 + $0x58] sm:$0xff]
        %v286 = vld [vmem:[%s238 + $0x60] sm:$0xff]
        %v287 = vld [vmem:[%s238 + $0x68] sm:$0xff]
        %v288 = vld [vmem:[%s238 + $0x70] sm:$0xff]
        %v289 = vld [vmem:[%s238 + $0x78] sm:$0xff]
        %v290 = vld [vmem:[%s238 + $0x80] sm:$0xff]
        %v291 = vld [vmem:[%s238 + $0x88] sm:$0xff]
        %v292 = vld [vmem:[%s238 + $0x90] sm:$0xff]
        %v293 = vld [vmem:[%s238 + $0x98] sm:$0xff]
        %v294 = vld [vmem:[%s238 + $0xa0] sm:$0xff]
        %v295 = vld [vmem:[%s238 + $0xa8] sm:$0xff]
        %v296 = vld [vmem:[%s238 + $0xb0] sm:$0xff]
        %v297 = vld [vmem:[%s238 + $0xb8] sm:$0xff]
        %v298 = vld [vmem:[%s238 + $0xc0] sm:$0xff]
        %v299 = vld [vmem:[%s238 + $0xc8] sm:$0xff]
        %v300 = vld [vmem:[%s238 + $0xd0] sm:$0xff]
        %v301 = vld [vmem:[%s238 + $0xd8] sm:$0xff]
        %v302 = vld [vmem:[%s238 + $0xe0] sm:$0xff]
        %v303 = vld [vmem:[%s238 + $0xe8] sm:$0xff]
        %v304 = vld [vmem:[%s238 + $0xf0] sm:$0xff]
        %v305 = vld [vmem:[%s238 + $0xf8] sm:$0xff]
        %v306 = vld [vmem:[%s1] sm:$0xff]
        %v307 = vld [vmem:[%s1 + $0x8] sm:$0xff]
        %v308 = vld [vmem:[%s1 + $0x10] sm:$0xff]
        %v309 = vld [vmem:[%s1 + $0x18] sm:$0xff]
        %v310 = vld [vmem:[%s1 + $0x20] sm:$0xff]
        %v311 = vld [vmem:[%s1 + $0x28] sm:$0xff]
        %v312 = vld [vmem:[%s1 + $0x30] sm:$0xff]
        %v313 = vld [vmem:[%s1 + $0x38] sm:$0xff]
        %v314 = vld [vmem:[%s1 + $0x40] sm:$0xff]
        %v315 = vld [vmem:[%s1 + $0x48] sm:$0xff]
        %v316 = vld [vmem:[%s1 + $0x50] sm:$0xff]
        %v317 = vld [vmem:[%s1 + $0x58] sm:$0xff]
        %v318 = vld [vmem:[%s1 + $0x60] sm:$0xff]
        %v319 = vld [vmem:[%s1 + $0x68] sm:$0xff]
        %v320 = vld [vmem:[%s1 + $0x70] sm:$0xff]
        %v321 = vld [vmem:[%s1 + $0x78] sm:$0xff]
        %v322 = vld [vmem:[%s2] sm:$0x1]
        %v324 = vlaneseq
        %v325 = vshrl.u32 %v324, 7
        %v326 = vsub.s32 0, %v325
        %v327 = vrot.slane %v322, %v326
        %329 = vmatprep.subr.mxu0 0.0
        %330 = vmatpush1.msra.mxu0 %v306
        %331 = vmatprep.subr.mxu0 0.0
        %332 = vmatpush1.msra.mxu0 %v307
        %333 = vmatprep.subr.mxu0 0.0
        %334 = vmatpush1.msra.mxu0 %v308
        %335 = vmatprep.subr.mxu0 0.0
        %336 = vmatpush1.msra.mxu0 %v309
        %337 = vmatprep.subr.mxu0 0.0
        %338 = vmatpush1.msra.mxu0 %v310
        %339 = vmatprep.subr.mxu0 0.0
        %340 = vmatpush1.msra.mxu0 %v311
        %341 = vmatprep.subr.mxu0 0.0
        %342 = vmatpush1.msra.mxu0 %v312
        %343 = vmatprep.subr.mxu0 0.0
        %344 = vmatpush1.msra.mxu0 %v313
        %345 = vmatprep.subr.mxu0 0.0
        %346 = vmatpush1.msra.mxu0 %v314
        %347 = vmatprep.subr.mxu0 0.0
        %348 = vmatpush1.msra.mxu0 %v315
        %349 = vmatprep.subr.mxu0 0.0
        %350 = vmatpush1.msra.mxu0 %v316
        %351 = vmatprep.subr.mxu0 0.0
        %352 = vmatpush1.msra.mxu0 %v317
        %353 = vmatprep.subr.mxu0 0.0
        %354 = vmatpush1.msra.mxu0 %v318
        %355 = vmatprep.subr.mxu0 0.0
        %356 = vmatpush1.msra.mxu0 %v319
        %357 = vmatprep.subr.mxu0 0.0
        %358 = vmatpush1.msra.mxu0 %v320
        %359 = vmatprep.subr.mxu0 0.0
        %360 = vmatpush1.msra.mxu0 %v321
        %361 = vmatprep.subr.mxu0 0.0
        %362 = vmatpush1.msra.mxu0 0.0
        %363 = vmatprep.subr.mxu0 0.0
        %364 = vmatpush1.msra.mxu0 0.0
        %365 = vmatprep.subr.mxu0 0.0
        %366 = vmatpush1.msra.mxu0 0.0
        %367 = vmatprep.subr.mxu0 0.0
        %368 = vmatpush1.msra.mxu0 0.0
        %369 = vmatprep.subr.mxu0 0.0
        %370 = vmatpush1.msra.mxu0 0.0
        %371 = vmatprep.subr.mxu0 0.0
        %372 = vmatpush1.msra.mxu0 0.0
        %373 = vmatprep.subr.mxu0 0.0
        %374 = vmatpush1.msra.mxu0 0.0
        %375 = vmatprep.subr.mxu0 0.0
        %376 = vmatpush1.msra.mxu0 0.0
        %377 = vmatprep.subr.mxu0 0.0
        %378 = vmatpush1.msra.mxu0 0.0
        %379 = vmatprep.subr.mxu0 0.0
        %380 = vmatpush1.msra.mxu0 0.0
        %381 = vmatprep.subr.mxu0 0.0
        %382 = vmatpush1.msra.mxu0 0.0
        %383 = vmatprep.subr.mxu0 0.0
        %384 = vmatpush1.msra.mxu0 0.0
        %385 = vmatprep.subr.mxu0 0.0
        %386 = vmatpush1.msra.mxu0 0.0
        %387 = vmatprep.subr.mxu0 0.0
        %388 = vmatpush1.msra.mxu0 0.0
        %389 = vmatprep.subr.mxu0 0.0
        %390 = vmatpush1.msra.mxu0 0.0
        %391 = vmatprep.subr.mxu0 0.0
        %392 = vmatpush1.msra.mxu0 0.0
        %393 = vmatprep.mubr.f32.mxu0 0.0
        %394 = vmatmul.mubr.f32.gmra.mrb[0].mxu0 %v274
        %v395 = vpop.f32.mrb[0].mxu0
        %v396 = vadd.f32 %v327, %v395
        %v397 = vpop.f32.mrb[0].mxu0
        %398 = vmatprep.mubr.f32.mxu0 0.0
        %399 = vmatmul.mubr.f32.gmra.mrb[0].mxu0 %v275
        %v400 = vpop.f32.mrb[0].mxu0
        %v401 = vadd.f32 %v327, %v400
        %v402 = vpop.f32.mrb[0].mxu0
        %403 = vmatprep.mubr.f32.mxu0 0.0
        %404 = vmatmul.mubr.f32.gmra.mrb[0].mxu0 %v276
        %v405 = vpop.f32.mrb[0].mxu0
        %v406 = vadd.f32 %v327, %v405
        %v407 = vpop.f32.mrb[0].mxu0
        %408 = vmatprep.mubr.f32.mxu0 0.0
        %409 = vmatmul.mubr.f32.gmra.mrb[0].mxu0 %v277
        %v410 = vpop.f32.mrb[0].mxu0
        %v411 = vadd.f32 %v327, %v410
        %v412 = vpop.f32.mrb[0].mxu0
        %413 = vmatprep.mubr.f32.mxu0 0.0
        %414 = vmatmul.mubr.f32.gmra.mrb[0].mxu0 %v278
        %v415 = vpop.f32.mrb[0].mxu0
        %v416 = vadd.f32 %v327, %v415
        %v417 = vpop.f32.mrb[0].mxu0
        %418 = vmatprep.mubr.f32.mxu0 0.0
        %419 = vmatmul.mubr.f32.gmra.mrb[0].mxu0 %v279
        %v420 = vpop.f32.mrb[0].mxu0
        %v421 = vadd.f32 %v327, %v420
        %v422 = vpop.f32.mrb[0].mxu0
        %423 = vmatprep.mubr.f32.mxu0 0.0
        %424 = vmatmul.mubr.f32.gmra.mrb[0].mxu0 %v280
        %v425 = vpop.f32.mrb[0].mxu0
        %v426 = vadd.f32 %v327, %v425
        %v427 = vpop.f32.mrb[0].mxu0
        %428 = vmatprep.mubr.f32.mxu0 0.0
        %429 = vmatmul.mubr.f32.gmra.mrb[0].mxu0 %v281
        %v430 = vpop.f32.mrb[0].mxu0
        %v431 = vadd.f32 %v327, %v430
        %v432 = vpop.f32.mrb[0].mxu0
        %433 = vmatprep.mubr.f32.mxu0 0.0
        %434 = vmatmul.mubr.f32.gmra.mrb[0].mxu0 %v282
        %v435 = vpop.f32.mrb[0].mxu0
        %v436 = vadd.f32 %v327, %v435
        %v437 = vpop.f32.mrb[0].mxu0
        %438 = vmatprep.mubr.f32.mxu0 0.0
        %439 = vmatmul.mubr.f32.gmra.mrb[0].mxu0 %v283
        %v440 = vpop.f32.mrb[0].mxu0
        %v441 = vadd.f32 %v327, %v440
        %v442 = vpop.f32.mrb[0].mxu0
        %443 = vmatprep.mubr.f32.mxu0 0.0
        %444 = vmatmul.mubr.f32.gmra.mrb[0].mxu0 %v284
        %v445 = vpop.f32.mrb[0].mxu0
        %v446 = vadd.f32 %v327, %v445
        %v447 = vpop.f32.mrb[0].mxu0
        %448 = vmatprep.mubr.f32.mxu0 0.0
        %449 = vmatmul.mubr.f32.gmra.mrb[0].mxu0 %v285
        %v450 = vpop.f32.mrb[0].mxu0
        %v451 = vadd.f32 %v327, %v450
        %v452 = vpop.f32.mrb[0].mxu0
        %453 = vmatprep.mubr.f32.mxu0 0.0
        %454 = vmatmul.mubr.f32.gmra.mrb[0].mxu0 %v286
        %v455 = vpop.f32.mrb[0].mxu0
        %v456 = vadd.f32 %v327, %v455
        %v457 = vpop.f32.mrb[0].mxu0
        %458 = vmatprep.mubr.f32.mxu0 0.0
        %459 = vmatmul.mubr.f32.gmra.mrb[0].mxu0 %v287
        %v460 = vpop.f32.mrb[0].mxu0
        %v461 = vadd.f32 %v327, %v460
        %v462 = vpop.f32.mrb[0].mxu0
        %463 = vmatprep.mubr.f32.mxu0 0.0
        %464 = vmatmul.mubr.f32.gmra.mrb[0].mxu0 %v288
        %v465 = vpop.f32.mrb[0].mxu0
        %v466 = vadd.f32 %v327, %v465
        %v467 = vpop.f32.mrb[0].mxu0
        %468 = vmatprep.mubr.f32.mxu0 0.0
        %469 = vmatmul.mubr.f32.gmra.mrb[0].mxu0 %v289
        %v470 = vpop.f32.mrb[0].mxu0
        %v471 = vadd.f32 %v327, %v470
        %v472 = vpop.f32.mrb[0].mxu0
        %473 = vmatprep.mubr.f32.mxu0 0.0
        %474 = vmatmul.mubr.f32.gmra.mrb[0].mxu0 %v290
        %v475 = vpop.f32.mrb[0].mxu0
        %v476 = vadd.f32 %v327, %v475
        %v477 = vpop.f32.mrb[0].mxu0
        %478 = vmatprep.mubr.f32.mxu0 0.0
        %479 = vmatmul.mubr.f32.gmra.mrb[0].mxu0 %v291
        %v480 = vpop.f32.mrb[0].mxu0
        %v481 = vadd.f32 %v327, %v480
        %v482 = vpop.f32.mrb[0].mxu0
        %483 = vmatprep.mubr.f32.mxu0 0.0
        %484 = vmatmul.mubr.f32.gmra.mrb[0].mxu0 %v292
        %v485 = vpop.f32.mrb[0].mxu0
        %v486 = vadd.f32 %v327, %v485
        %v487 = vpop.f32.mrb[0].mxu0
        %488 = vmatprep.mubr.f32.mxu0 0.0
        %489 = vmatmul.mubr.f32.gmra.mrb[0].mxu0 %v293
        %v490 = vpop.f32.mrb[0].mxu0
        %v491 = vadd.f32 %v327, %v490
        %v492 = vpop.f32.mrb[0].mxu0
        %493 = vmatprep.mubr.f32.mxu0 0.0
        %494 = vmatmul.mubr.f32.gmra.mrb[0].mxu0 %v294
        %v495 = vpop.f32.mrb[0].mxu0
        %v496 = vadd.f32 %v327, %v495
        %v497 = vpop.f32.mrb[0].mxu0
        %498 = vmatprep.mubr.f32.mxu0 0.0
        %499 = vmatmul.mubr.f32.gmra.mrb[0].mxu0 %v295
        %v500 = vpop.f32.mrb[0].mxu0
        %v501 = vadd.f32 %v327, %v500
        %v502 = vpop.f32.mrb[0].mxu0
        %503 = vmatprep.mubr.f32.mxu0 0.0
        %504 = vmatmul.mubr.f32.gmra.mrb[0].mxu0 %v296
        %v505 = vpop.f32.mrb[0].mxu0
        %v506 = vadd.f32 %v327, %v505
        %v507 = vpop.f32.mrb[0].mxu0
        %508 = vmatprep.mubr.f32.mxu0 0.0
        %509 = vmatmul.mubr.f32.gmra.mrb[0].mxu0 %v297
        %v510 = vpop.f32.mrb[0].mxu0
        %v511 = vadd.f32 %v327, %v510
        %v512 = vpop.f32.mrb[0].mxu0
        %513 = vmatprep.mubr.f32.mxu0 0.0
        %514 = vmatmul.mubr.f32.gmra.mrb[0].mxu0 %v298
        %v515 = vpop.f32.mrb[0].mxu0
        %v516 = vadd.f32 %v327, %v515
        %v517 = vpop.f32.mrb[0].mxu0
        %518 = vmatprep.mubr.f32.mxu0 0.0
        %519 = vmatmul.mubr.f32.gmra.mrb[0].mxu0 %v299
        %v520 = vpop.f32.mrb[0].mxu0
        %v521 = vadd.f32 %v327, %v520
        %v522 = vpop.f32.mrb[0].mxu0
        %523 = vmatprep.mubr.f32.mxu0 0.0
        %524 = vmatmul.mubr.f32.gmra.mrb[0].mxu0 %v300
        %v525 = vpop.f32.mrb[0].mxu0
        %v526 = vadd.f32 %v327, %v525
        %v527 = vpop.f32.mrb[0].mxu0
        %528 = vmatprep.mubr.f32.mxu0 0.0
        %529 = vmatmul.mubr.f32.gmra.mrb[0].mxu0 %v301
        %v530 = vpop.f32.mrb[0].mxu0
        %v531 = vadd.f32 %v327, %v530
        %v532 = vpop.f32.mrb[0].mxu0
        %533 = vmatprep.mubr.f32.mxu0 0.0
        %534 = vmatmul.mubr.f32.gmra.mrb[0].mxu0 %v302
        %v535 = vpop.f32.mrb[0].mxu0
        %v536 = vadd.f32 %v327, %v535
        %v537 = vpop.f32.mrb[0].mxu0
        %538 = vmatprep.mubr.f32.mxu0 0.0
        %539 = vmatmul.mubr.f32.gmra.mrb[0].mxu0 %v303
        %v540 = vpop.f32.mrb[0].mxu0
        %v541 = vadd.f32 %v327, %v540
        %v542 = vpop.f32.mrb[0].mxu0
        %543 = vmatprep.mubr.f32.mxu0 0.0
        %544 = vmatmul.mubr.f32.gmra.mrb[0].mxu0 %v304
        %v545 = vpop.f32.mrb[0].mxu0
        %v546 = vadd.f32 %v327, %v545
        %v547 = vpop.f32.mrb[0].mxu0
        %548 = vmatprep.mubr.f32.mxu0 0.0
        %549 = vmatmul.mubr.f32.gmra.mrb[0].mxu0 %v305
        %v550 = vpop.f32.mrb[0].mxu0
        %v551 = vadd.f32 %v327, %v550
        %v552 = vpop.f32.mrb[0].mxu0
        %553 = vdwg.mxu0
        %v554 = vmax.f32 %v396, 0.0
        %v555 = vmax.f32 %v401, 0.0
        %v556 = vmax.f32 %v406, 0.0
        %v557 = vmax.f32 %v411, 0.0
        %v558 = vmax.f32 %v416, 0.0
        %v559 = vmax.f32 %v421, 0.0
        %v560 = vmax.f32 %v426, 0.0
        %v561 = vmax.f32 %v431, 0.0
        %v562 = vmax.f32 %v436, 0.0
        %v563 = vmax.f32 %v441, 0.0
        %v564 = vmax.f32 %v446, 0.0
        %v565 = vmax.f32 %v451, 0.0
        %v566 = vmax.f32 %v456, 0.0
        %v567 = vmax.f32 %v461, 0.0
        %v568 = vmax.f32 %v466, 0.0
        %v569 = vmax.f32 %v471, 0.0
        %v570 = vmax.f32 %v476, 0.0
        %v571 = vmax.f32 %v481, 0.0
        %v572 = vmax.f32 %v486, 0.0
        %v573 = vmax.f32 %v491, 0.0
        %v574 = vmax.f32 %v496, 0.0
        %v575 = vmax.f32 %v501, 0.0
        %v576 = vmax.f32 %v506, 0.0
        %v577 = vmax.f32 %v511, 0.0
        %v578 = vmax.f32 %v516, 0.0
        %v579 = vmax.f32 %v521, 0.0
        %v580 = vmax.f32 %v526, 0.0
        %v581 = vmax.f32 %v531, 0.0
        %v582 = vmax.f32 %v536, 0.0
        %v583 = vmax.f32 %v541, 0.0
        %v584 = vmax.f32 %v546, 0.0
        %v585 = vmax.f32 %v551, 0.0
        %v586 = vld [vmem:[%s3] sm:$0xff]
        %v587 = vld [vmem:[%s3 + $0x8] sm:$0xff]
        %v588 = vld [vmem:[%s3 + $0x10] sm:$0xff]
        %v589 = vld [vmem:[%s3 + $0x18] sm:$0xff]
        %v590 = vld [vmem:[%s3 + $0x20] sm:$0xff]
        %v591 = vld [vmem:[%s3 + $0x28] sm:$0xff]
        %v592 = vld [vmem:[%s3 + $0x30] sm:$0xff]
        %v593 = vld [vmem:[%s3 + $0x38] sm:$0xff]
        %v594 = vld [vmem:[%s3 + $0x40] sm:$0xff]
        %v595 = vld [vmem:[%s3 + $0x48] sm:$0xff]
        %v596 = vld [vmem:[%s3 + $0x50] sm:$0xff]
        %v597 = vld [vmem:[%s3 + $0x58] sm:$0xff]
        %v598 = vld [vmem:[%s3 + $0x60] sm:$0xff]
        %v599 = vld [vmem:[%s3 + $0x68] sm:$0xff]
        %v600 = vld [vmem:[%s3 + $0x70] sm:$0xff]
        %v601 = vld [vmem:[%s3 + $0x78] sm:$0xff]
        %v602 = vld [vmem:[%s4] sm:$0x1]
        %v604 = vlaneseq
        %v605 = vshrl.u32 %v604, 7
        %v606 = vsub.s32 0, %v605
        %v607 = vrot.slane %v602, %v606
        %609 = vmatprep.subr.mxu0 0.0
        %610 = vmatpush1.msra.mxu0 %v586
        %611 = vmatprep.subr.mxu0 0.0
        %612 = vmatpush1.msra.mxu0 %v587
        %613 = vmatprep.subr.mxu0 0.0
        %614 = vmatpush1.msra.mxu0 %v588
        %615 = vmatprep.subr.mxu0 0.0
        %616 = vmatpush1.msra.mxu0 %v589
        %617 = vmatprep.subr.mxu0 0.0
        %618 = vmatpush1.msra.mxu0 %v590
        %619 = vmatprep.subr.mxu0 0.0
        %620 = vmatpush1.msra.mxu0 %v591
        %621 = vmatprep.subr.mxu0 0.0
        %622 = vmatpush1.msra.mxu0 %v592
        %623 = vmatprep.subr.mxu0 0.0
        %624 = vmatpush1.msra.mxu0 %v593
        %625 = vmatprep.subr.mxu0 0.0
        %626 = vmatpush1.msra.mxu0 %v594
        %627 = vmatprep.subr.mxu0 0.0
        %628 = vmatpush1.msra.mxu0 %v595
        %629 = vmatprep.subr.mxu0 0.0
        %630 = vmatpush1.msra.mxu0 %v596
        %631 = vmatprep.subr.mxu0 0.0
        %632 = vmatpush1.msra.mxu0 %v597
        %633 = vmatprep.subr.mxu0 0.0
        %634 = vmatpush1.msra.mxu0 %v598
        %635 = vmatprep.subr.mxu0 0.0
        %636 = vmatpush1.msra.mxu0 %v599
        %637 = vmatprep.subr.mxu0 0.0
        %638 = vmatpush1.msra.mxu0 %v600
        %639 = vmatprep.subr.mxu0 0.0
        %640 = vmatpush1.msra.mxu0 %v601
        %641 = vmatprep.subr.mxu0 0.0
        %642 = vmatpush1.msra.mxu0 0.0
        %643 = vmatprep.subr.mxu0 0.0
        %644 = vmatpush1.msra.mxu0 0.0
        %645 = vmatprep.subr.mxu0 0.0
        %646 = vmatpush1.msra.mxu0 0.0
        %647 = vmatprep.subr.mxu0 0.0
        %648 = vmatpush1.msra.mxu0 0.0
        %649 = vmatprep.subr.mxu0 0.0
        %650 = vmatpush1.msra.mxu0 0.0
        %651 = vmatprep.subr.mxu0 0.0
        %652 = vmatpush1.msra.mxu0 0.0
        %653 = vmatprep.subr.mxu0 0.0
        %654 = vmatpush1.msra.mxu0 0.0
        %655 = vmatprep.subr.mxu0 0.0
        %656 = vmatpush1.msra.mxu0 0.0
        %657 = vmatprep.subr.mxu0 0.0
        %658 = vmatpush1.msra.mxu0 0.0
        %659 = vmatprep.subr.mxu0 0.0
        %660 = vmatpush1.msra.mxu0 0.0
        %661 = vmatprep.subr.mxu0 0.0
        %662 = vmatpush1.msra.mxu0 0.0
        %663 = vmatprep.subr.mxu0 0.0
        %664 = vmatpush1.msra.mxu0 0.0
        %665 = vmatprep.subr.mxu0 0.0
        %666 = vmatpush1.msra.mxu0 0.0
        %667 = vmatprep.subr.mxu0 0.0
        %668 = vmatpush1.msra.mxu0 0.0
        %669 = vmatprep.subr.mxu0 0.0
        %670 = vmatpush1.msra.mxu0 0.0
        %671 = vmatprep.subr.mxu0 0.0
        %672 = vmatpush1.msra.mxu0 0.0
        %673 = vmatprep.mubr.f32.mxu0 0.0
        %674 = vmatmul.mubr.f32.gmra.mrb[0].mxu0 %v554
        %v675 = vpop.f32.mrb[0].mxu0
        %v676 = vadd.f32 %v607, %v675
        %v677 = vpop.f32.mrb[0].mxu0
        %678 = vmatprep.mubr.f32.mxu0 0.0
        %679 = vmatmul.mubr.f32.gmra.mrb[0].mxu0 %v555
        %v680 = vpop.f32.mrb[0].mxu0
        %v681 = vadd.f32 %v607, %v680
        %v682 = vpop.f32.mrb[0].mxu0
        %683 = vmatprep.mubr.f32.mxu0 0.0
        %684 = vmatmul.mubr.f32.gmra.mrb[0].mxu0 %v556
        %v685 = vpop.f32.mrb[0].mxu0
        %v686 = vadd.f32 %v607, %v685
        %v687 = vpop.f32.mrb[0].mxu0
        %688 = vmatprep.mubr.f32.mxu0 0.0
        %689 = vmatmul.mubr.f32.gmra.mrb[0].mxu0 %v557
        %v690 = vpop.f32.mrb[0].mxu0
        %v691 = vadd.f32 %v607, %v690
        %v692 = vpop.f32.mrb[0].mxu0
        %693 = vmatprep.mubr.f32.mxu0 0.0
        %694 = vmatmul.mubr.f32.gmra.mrb[0].mxu0 %v558
        %v695 = vpop.f32.mrb[0].mxu0
        %v696 = vadd.f32 %v607, %v695
        %v697 = vpop.f32.mrb[0].mxu0
        %698 = vmatprep.mubr.f32.mxu0 0.0
        %699 = vmatmul.mubr.f32.gmra.mrb[0].mxu0 %v559
        %v700 = vpop.f32.mrb[0].mxu0
        %v701 = vadd.f32 %v607, %v700
        %v702 = vpop.f32.mrb[0].mxu0
        %703 = vmatprep.mubr.f32.mxu0 0.0
        %704 = vmatmul.mubr.f32.gmra.mrb[0].mxu0 %v560
        %v705 = vpop.f32.mrb[0].mxu0
        %v706 = vadd.f32 %v607, %v705
        %v707 = vpop.f32.mrb[0].mxu0
        %708 = vmatprep.mubr.f32.mxu0 0.0
        %709 = vmatmul.mubr.f32.gmra.mrb[0].mxu0 %v561
        %v710 = vpop.f32.mrb[0].mxu0
        %v711 = vadd.f32 %v607, %v710
        %v712 = vpop.f32.mrb[0].mxu0
        %713 = vmatprep.mubr.f32.mxu0 0.0
        %714 = vmatmul.mubr.f32.gmra.mrb[0].mxu0 %v562
        %v715 = vpop.f32.mrb[0].mxu0
        %v716 = vadd.f32 %v607, %v715
        %v717 = vpop.f32.mrb[0].mxu0
        %718 = vmatprep.mubr.f32.mxu0 0.0
        %719 = vmatmul.mubr.f32.gmra.mrb[0].mxu0 %v563
        %v720 = vpop.f32.mrb[0].mxu0
        %v721 = vadd.f32 %v607, %v720
        %v722 = vpop.f32.mrb[0].mxu0
        %723 = vmatprep.mubr.f32.mxu0 0.0
        %724 = vmatmul.mubr.f32.gmra.mrb[0].mxu0 %v564
        %v725 = vpop.f32.mrb[0].mxu0
        %v726 = vadd.f32 %v607, %v725
        %v727 = vpop.f32.mrb[0].mxu0
        %728 = vmatprep.mubr.f32.mxu0 0.0
        %729 = vmatmul.mubr.f32.gmra.mrb[0].mxu0 %v565
        %v730 = vpop.f32.mrb[0].mxu0
        %v731 = vadd.f32 %v607, %v730
        %v732 = vpop.f32.mrb[0].mxu0
        %733 = vmatprep.mubr.f32.mxu0 0.0
        %734 = vmatmul.mubr.f32.gmra.mrb[0].mxu0 %v566
        %v735 = vpop.f32.mrb[0].mxu0
        %v736 = vadd.f32 %v607, %v735
        %v737 = vpop.f32.mrb[0].mxu0
        %738 = vmatprep.mubr.f32.mxu0 0.0
        %739 = vmatmul.mubr.f32.gmra.mrb[0].mxu0 %v567
        %v740 = vpop.f32.mrb[0].mxu0
        %v741 = vadd.f32 %v607, %v740
        %v742 = vpop.f32.mrb[0].mxu0
        %743 = vmatprep.mubr.f32.mxu0 0.0
        %744 = vmatmul.mubr.f32.gmra.mrb[0].mxu0 %v568
        %v745 = vpop.f32.mrb[0].mxu0
        %v746 = vadd.f32 %v607, %v745
        %v747 = vpop.f32.mrb[0].mxu0
        %748 = vmatprep.mubr.f32.mxu0 0.0
        %749 = vmatmul.mubr.f32.gmra.mrb[0].mxu0 %v569
        %v750 = vpop.f32.mrb[0].mxu0
        %v751 = vadd.f32 %v607, %v750
        %v752 = vpop.f32.mrb[0].mxu0
        %753 = vmatprep.mubr.f32.mxu0 0.0
        %754 = vmatmul.mubr.f32.gmra.mrb[0].mxu0 %v570
        %v755 = vpop.f32.mrb[0].mxu0
        %v756 = vadd.f32 %v607, %v755
        %v757 = vpop.f32.mrb[0].mxu0
        %758 = vmatprep.mubr.f32.mxu0 0.0
        %759 = vmatmul.mubr.f32.gmra.mrb[0].mxu0 %v571
        %v760 = vpop.f32.mrb[0].mxu0
        %v761 = vadd.f32 %v607, %v760
        %v762 = vpop.f32.mrb[0].mxu0
        %763 = vmatprep.mubr.f32.mxu0 0.0
        %764 = vmatmul.mubr.f32.gmra.mrb[0].mxu0 %v572
        %v765 = vpop.f32.mrb[0].mxu0
        %v766 = vadd.f32 %v607, %v765
        %v767 = vpop.f32.mrb[0].mxu0
        %768 = vmatprep.mubr.f32.mxu0 0.0
        %769 = vmatmul.mubr.f32.gmra.mrb[0].mxu0 %v573
        %v770 = vpop.f32.mrb[0].mxu0
        %v771 = vadd.f32 %v607, %v770
        %v772 = vpop.f32.mrb[0].mxu0
        %773 = vmatprep.mubr.f32.mxu0 0.0
        %774 = vmatmul.mubr.f32.gmra.mrb[0].mxu0 %v574
        %v775 = vpop.f32.mrb[0].mxu0
        %v776 = vadd.f32 %v607, %v775
        %v777 = vpop.f32.mrb[0].mxu0
        %778 = vmatprep.mubr.f32.mxu0 0.0
        %779 = vmatmul.mubr.f32.gmra.mrb[0].mxu0 %v575
        %v780 = vpop.f32.mrb[0].mxu0
        %v781 = vadd.f32 %v607, %v780
        %v782 = vpop.f32.mrb[0].mxu0
        %783 = vmatprep.mubr.f32.mxu0 0.0
        %784 = vmatmul.mubr.f32.gmra.mrb[0].mxu0 %v576
        %v785 = vpop.f32.mrb[0].mxu0
        %v786 = vadd.f32 %v607, %v785
        %v787 = vpop.f32.mrb[0].mxu0
        %788 = vmatprep.mubr.f32.mxu0 0.0
        %789 = vmatmul.mubr.f32.gmra.mrb[0].mxu0 %v577
        %v790 = vpop.f32.mrb[0].mxu0
        %v791 = vadd.f32 %v607, %v790
        %v792 = vpop.f32.mrb[0].mxu0
        %793 = vmatprep.mubr.f32.mxu0 0.0
        %794 = vmatmul.mubr.f32.gmra.mrb[0].mxu0 %v578
        %v795 = vpop.f32.mrb[0].mxu0
        %v796 = vadd.f32 %v607, %v795
        %v797 = vpop.f32.mrb[0].mxu0
        %798 = vmatprep.mubr.f32.mxu0 0.0
        %799 = vmatmul.mubr.f32.gmra.mrb[0].mxu0 %v579
        %v800 = vpop.f32.mrb[0].mxu0
        %v801 = vadd.f32 %v607, %v800
        %v802 = vpop.f32.mrb[0].mxu0
        %803 = vmatprep.mubr.f32.mxu0 0.0
        %804 = vmatmul.mubr.f32.gmra.mrb[0].mxu0 %v580
        %v805 = vpop.f32.mrb[0].mxu0
        %v806 = vadd.f32 %v607, %v805
        %v807 = vpop.f32.mrb[0].mxu0
        %808 = vmatprep.mubr.f32.mxu0 0.0
        %809 = vmatmul.mubr.f32.gmra.mrb[0].mxu0 %v581
        %v810 = vpop.f32.mrb[0].mxu0
        %v811 = vadd.f32 %v607, %v810
        %v812 = vpop.f32.mrb[0].mxu0
        %813 = vmatprep.mubr.f32.mxu0 0.0
        %814 = vmatmul.mubr.f32.gmra.mrb[0].mxu0 %v582
        %v815 = vpop.f32.mrb[0].mxu0
        %v816 = vadd.f32 %v607, %v815
        %v817 = vpop.f32.mrb[0].mxu0
        %818 = vmatprep.mubr.f32.mxu0 0.0
        %819 = vmatmul.mubr.f32.gmra.mrb[0].mxu0 %v583
        %v820 = vpop.f32.mrb[0].mxu0
        %v821 = vadd.f32 %v607, %v820
        %v822 = vpop.f32.mrb[0].mxu0
        %823 = vmatprep.mubr.f32.mxu0 0.0
        %824 = vmatmul.mubr.f32.gmra.mrb[0].mxu0 %v584
        %v825 = vpop.f32.mrb[0].mxu0
        %v826 = vadd.f32 %v607, %v825
        %v827 = vpop.f32.mrb[0].mxu0
        %828 = vmatprep.mubr.f32.mxu0 0.0
        %829 = vmatmul.mubr.f32.gmra.mrb[0].mxu0 %v585
        %v830 = vpop.f32.mrb[0].mxu0
        %v831 = vadd.f32 %v607, %v830
        %v832 = vpop.f32.mrb[0].mxu0
        %833 = vdwg.mxu0
        %v834 = vmax.f32 %v676, 0.0
        %v835 = vmax.f32 %v681, 0.0
        %v836 = vmax.f32 %v686, 0.0
        %v837 = vmax.f32 %v691, 0.0
        %v838 = vmax.f32 %v696, 0.0
        %v839 = vmax.f32 %v701, 0.0
        %v840 = vmax.f32 %v706, 0.0
        %v841 = vmax.f32 %v711, 0.0
        %v842 = vmax.f32 %v716, 0.0
        %v843 = vmax.f32 %v721, 0.0
        %v844 = vmax.f32 %v726, 0.0
        %v845 = vmax.f32 %v731, 0.0
        %v846 = vmax.f32 %v736, 0.0
        %v847 = vmax.f32 %v741, 0.0
        %v848 = vmax.f32 %v746, 0.0
        %v849 = vmax.f32 %v751, 0.0
        %v850 = vmax.f32 %v756, 0.0
        %v851 = vmax.f32 %v761, 0.0
        %v852 = vmax.f32 %v766, 0.0
        %v853 = vmax.f32 %v771, 0.0
        %v854 = vmax.f32 %v776, 0.0
        %v855 = vmax.f32 %v781, 0.0
        %v856 = vmax.f32 %v786, 0.0
        %v857 = vmax.f32 %v791, 0.0
        %v858 = vmax.f32 %v796, 0.0
        %v859 = vmax.f32 %v801, 0.0
        %v860 = vmax.f32 %v806, 0.0
        %v861 = vmax.f32 %v811, 0.0
        %v862 = vmax.f32 %v816, 0.0
        %v863 = vmax.f32 %v821, 0.0
        %v864 = vmax.f32 %v826, 0.0
        %v865 = vmax.f32 %v831, 0.0
        %v866 = vld [vmem:[%s5] sm:$0xff]
        %v867 = vld [vmem:[%s5 + $0x8] sm:$0xff]
        %v868 = vld [vmem:[%s5 + $0x10] sm:$0xff]
        %v869 = vld [vmem:[%s5 + $0x18] sm:$0xff]
        %v870 = vld [vmem:[%s5 + $0x20] sm:$0xff]
        %v871 = vld [vmem:[%s5 + $0x28] sm:$0xff]
        %v872 = vld [vmem:[%s5 + $0x30] sm:$0xff]
        %v873 = vld [vmem:[%s5 + $0x38] sm:$0xff]
        %v874 = vld [vmem:[%s5 + $0x40] sm:$0xff]
        %v875 = vld [vmem:[%s5 + $0x48] sm:$0xff]
        %v876 = vld [vmem:[%s5 + $0x50] sm:$0xff]
        %v877 = vld [vmem:[%s5 + $0x58] sm:$0xff]
        %v878 = vld [vmem:[%s5 + $0x60] sm:$0xff]
        %v879 = vld [vmem:[%s5 + $0x68] sm:$0xff]
        %v880 = vld [vmem:[%s5 + $0x70] sm:$0xff]
        %v881 = vld [vmem:[%s5 + $0x78] sm:$0xff]
        %882 = vmatprep.subr.mxu0 0.0
        %883 = vmatpush1.msra.mxu0 %v866
        %884 = vmatprep.subr.mxu0 0.0
        %885 = vmatpush1.msra.mxu0 %v867
        %886 = vmatprep.subr.mxu0 0.0
        %887 = vmatpush1.msra.mxu0 %v868
        %888 = vmatprep.subr.mxu0 0.0
        %889 = vmatpush1.msra.mxu0 %v869
        %890 = vmatprep.subr.mxu0 0.0
        %891 = vmatpush1.msra.mxu0 %v870
        %892 = vmatprep.subr.mxu0 0.0
        %893 = vmatpush1.msra.mxu0 %v871
        %894 = vmatprep.subr.mxu0 0.0
        %895 = vmatpush1.msra.mxu0 %v872
        %896 = vmatprep.subr.mxu0 0.0
        %897 = vmatpush1.msra.mxu0 %v873
        %898 = vmatprep.subr.mxu0 0.0
        %899 = vmatpush1.msra.mxu0 %v874
        %900 = vmatprep.subr.mxu0 0.0
        %901 = vmatpush1.msra.mxu0 %v875
        %902 = vmatprep.subr.mxu0 0.0
        %903 = vmatpush1.msra.mxu0 %v876
        %904 = vmatprep.subr.mxu0 0.0
        %905 = vmatpush1.msra.mxu0 %v877
        %906 = vmatprep.subr.mxu0 0.0
        %907 = vmatpush1.msra.mxu0 %v878
        %908 = vmatprep.subr.mxu0 0.0
        %909 = vmatpush1.msra.mxu0 %v879
        %910 = vmatprep.subr.mxu0 0.0
        %911 = vmatpush1.msra.mxu0 %v880
        %912 = vmatprep.subr.mxu0 0.0
        %913 = vmatpush1.msra.mxu0 %v881
        %914 = vmatprep.subr.mxu0 0.0
        %915 = vmatpush1.msra.mxu0 0.0
        %916 = vmatprep.subr.mxu0 0.0
        %917 = vmatpush1.msra.mxu0 0.0
        %918 = vmatprep.subr.mxu0 0.0
        %919 = vmatpush1.msra.mxu0 0.0
        %920 = vmatprep.subr.mxu0 0.0
        %921 = vmatpush1.msra.mxu0 0.0
        %922 = vmatprep.subr.mxu0 0.0
        %923 = vmatpush1.msra.mxu0 0.0
        %924 = vmatprep.subr.mxu0 0.0
        %925 = vmatpush1.msra.mxu0 0.0
        %926 = vmatprep.subr.mxu0 0.0
        %927 = vmatpush1.msra.mxu0 0.0
        %928 = vmatprep.subr.mxu0 0.0
        %929 = vmatpush1.msra.mxu0 0.0
        %930 = vmatprep.subr.mxu0 0.0
        %931 = vmatpush1.msra.mxu0 0.0
        %932 = vmatprep.subr.mxu0 0.0
        %933 = vmatpush1.msra.mxu0 0.0
        %934 = vmatprep.subr.mxu0 0.0
        %935 = vmatpush1.msra.mxu0 0.0
        %936 = vmatprep.subr.mxu0 0.0
        %937 = vmatpush1.msra.mxu0 0.0
        %938 = vmatprep.subr.mxu0 0.0
        %939 = vmatpush1.msra.mxu0 0.0
        %940 = vmatprep.subr.mxu0 0.0
        %941 = vmatpush1.msra.mxu0 0.0
        %942 = vmatprep.subr.mxu0 0.0
        %943 = vmatpush1.msra.mxu0 0.0
        %944 = vmatprep.subr.mxu0 0.0
        %945 = vmatpush1.msra.mxu0 0.0
        %946 = vmatprep.mubr.f32.mxu0 0.0
        %947 = vmatmul.mubr.f32.gmra.mrb[0].mxu0 %v834
        %v948 = vpop.f32.mrb[0].mxu0
        %v949 = vadd.f32 0.0, %v948
        %v950 = vpop.f32.mrb[0].mxu0
        %951 = vmatprep.mubr.f32.mxu0 0.0
        %952 = vmatmul.mubr.f32.gmra.mrb[0].mxu0 %v835
        %v953 = vpop.f32.mrb[0].mxu0
        %v954 = vadd.f32 0.0, %v953
        %v955 = vpop.f32.mrb[0].mxu0
        %956 = vmatprep.mubr.f32.mxu0 0.0
        %957 = vmatmul.mubr.f32.gmra.mrb[0].mxu0 %v836
        %v958 = vpop.f32.mrb[0].mxu0
        %v959 = vadd.f32 0.0, %v958
        %v960 = vpop.f32.mrb[0].mxu0
        %961 = vmatprep.mubr.f32.mxu0 0.0
        %962 = vmatmul.mubr.f32.gmra.mrb[0].mxu0 %v837
        %v963 = vpop.f32.mrb[0].mxu0
        %v964 = vadd.f32 0.0, %v963
        %v965 = vpop.f32.mrb[0].mxu0
        %966 = vmatprep.mubr.f32.mxu0 0.0
        %967 = vmatmul.mubr.f32.gmra.mrb[0].mxu0 %v838
        %v968 = vpop.f32.mrb[0].mxu0
        %v969 = vadd.f32 0.0, %v968
        %v970 = vpop.f32.mrb[0].mxu0
        %971 = vmatprep.mubr.f32.mxu0 0.0
        %972 = vmatmul.mubr.f32.gmra.mrb[0].mxu0 %v839
        %v973 = vpop.f32.mrb[0].mxu0
        %v974 = vadd.f32 0.0, %v973
        %v975 = vpop.f32.mrb[0].mxu0
        %976 = vmatprep.mubr.f32.mxu0 0.0
        %977 = vmatmul.mubr.f32.gmra.mrb[0].mxu0 %v840
        %v978 = vpop.f32.mrb[0].mxu0
        %v979 = vadd.f32 0.0, %v978
        %v980 = vpop.f32.mrb[0].mxu0
        %981 = vmatprep.mubr.f32.mxu0 0.0
        %982 = vmatmul.mubr.f32.gmra.mrb[0].mxu0 %v841
        %v983 = vpop.f32.mrb[0].mxu0
        %v984 = vadd.f32 0.0, %v983
        %v985 = vpop.f32.mrb[0].mxu0
        %986 = vmatprep.mubr.f32.mxu0 0.0
        %987 = vmatmul.mubr.f32.gmra.mrb[0].mxu0 %v842
        %v988 = vpop.f32.mrb[0].mxu0
        %v989 = vadd.f32 0.0, %v988
        %v990 = vpop.f32.mrb[0].mxu0
        %991 = vmatprep.mubr.f32.mxu0 0.0
        %992 = vmatmul.mubr.f32.gmra.mrb[0].mxu0 %v843
        %v993 = vpop.f32.mrb[0].mxu0
        %v994 = vadd.f32 0.0, %v993
        %v995 = vpop.f32.mrb[0].mxu0
        %996 = vmatprep.mubr.f32.mxu0 0.0
        %997 = vmatmul.mubr.f32.gmra.mrb[0].mxu0 %v844
        %v998 = vpop.f32.mrb[0].mxu0
        %v999 = vadd.f32 0.0, %v998
        %v1000 = vpop.f32.mrb[0].mxu0
        %1001 = vmatprep.mubr.f32.mxu0 0.0
        %1002 = vmatmul.mubr.f32.gmra.mrb[0].mxu0 %v845
        %v1003 = vpop.f32.mrb[0].mxu0
        %v1004 = vadd.f32 0.0, %v1003
        %v1005 = vpop.f32.mrb[0].mxu0
        %1006 = vmatprep.mubr.f32.mxu0 0.0
        %1007 = vmatmul.mubr.f32.gmra.mrb[0].mxu0 %v846
        %v1008 = vpop.f32.mrb[0].mxu0
        %v1009 = vadd.f32 0.0, %v1008
        %v1010 = vpop.f32.mrb[0].mxu0
        %1011 = vmatprep.mubr.f32.mxu0 0.0
        %1012 = vmatmul.mubr.f32.gmra.mrb[0].mxu0 %v847
        %v1013 = vpop.f32.mrb[0].mxu0
        %v1014 = vadd.f32 0.0, %v1013
        %v1015 = vpop.f32.mrb[0].mxu0
        %1016 = vmatprep.mubr.f32.mxu0 0.0
        %1017 = vmatmul.mubr.f32.gmra.mrb[0].mxu0 %v848
        %v1018 = vpop.f32.mrb[0].mxu0
        %v1019 = vadd.f32 0.0, %v1018
        %v1020 = vpop.f32.mrb[0].mxu0
        %1021 = vmatprep.mubr.f32.mxu0 0.0
        %1022 = vmatmul.mubr.f32.gmra.mrb[0].mxu0 %v849
        %v1023 = vpop.f32.mrb[0].mxu0
        %v1024 = vadd.f32 0.0, %v1023
        %v1025 = vpop.f32.mrb[0].mxu0
        %1026 = vmatprep.mubr.f32.mxu0 0.0
        %1027 = vmatmul.mubr.f32.gmra.mrb[0].mxu0 %v850
        %v1028 = vpop.f32.mrb[0].mxu0
        %v1029 = vadd.f32 0.0, %v1028
        %v1030 = vpop.f32.mrb[0].mxu0
        %1031 = vmatprep.mubr.f32.mxu0 0.0
        %1032 = vmatmul.mubr.f32.gmra.mrb[0].mxu0 %v851
        %v1033 = vpop.f32.mrb[0].mxu0
        %v1034 = vadd.f32 0.0, %v1033
        %v1035 = vpop.f32.mrb[0].mxu0
        %1036 = vmatprep.mubr.f32.mxu0 0.0
        %1037 = vmatmul.mubr.f32.gmra.mrb[0].mxu0 %v852
        %v1038 = vpop.f32.mrb[0].mxu0
        %v1039 = vadd.f32 0.0, %v1038
        %v1040 = vpop.f32.mrb[0].mxu0
        %1041 = vmatprep.mubr.f32.mxu0 0.0
        %1042 = vmatmul.mubr.f32.gmra.mrb[0].mxu0 %v853
        %v1043 = vpop.f32.mrb[0].mxu0
        %v1044 = vadd.f32 0.0, %v1043
        %v1045 = vpop.f32.mrb[0].mxu0
        %1046 = vmatprep.mubr.f32.mxu0 0.0
        %1047 = vmatmul.mubr.f32.gmra.mrb[0].mxu0 %v854
        %v1048 = vpop.f32.mrb[0].mxu0
        %v1049 = vadd.f32 0.0, %v1048
        %v1050 = vpop.f32.mrb[0].mxu0
        %1051 = vmatprep.mubr.f32.mxu0 0.0
        %1052 = vmatmul.mubr.f32.gmra.mrb[0].mxu0 %v855
        %v1053 = vpop.f32.mrb[0].mxu0
        %v1054 = vadd.f32 0.0, %v1053
        %v1055 = vpop.f32.mrb[0].mxu0
        %1056 = vmatprep.mubr.f32.mxu0 0.0
        %1057 = vmatmul.mubr.f32.gmra.mrb[0].mxu0 %v856
        %v1058 = vpop.f32.mrb[0].mxu0
        %v1059 = vadd.f32 0.0, %v1058
        %v1060 = vpop.f32.mrb[0].mxu0
        %1061 = vmatprep.mubr.f32.mxu0 0.0
        %1062 = vmatmul.mubr.f32.gmra.mrb[0].mxu0 %v857
        %v1063 = vpop.f32.mrb[0].mxu0
        %v1064 = vadd.f32 0.0, %v1063
        %v1065 = vpop.f32.mrb[0].mxu0
        %1066 = vmatprep.mubr.f32.mxu0 0.0
        %1067 = vmatmul.mubr.f32.gmra.mrb[0].mxu0 %v858
        %v1068 = vpop.f32.mrb[0].mxu0
        %v1069 = vadd.f32 0.0, %v1068
        %v1070 = vpop.f32.mrb[0].mxu0
        %1071 = vmatprep.mubr.f32.mxu0 0.0
        %1072 = vmatmul.mubr.f32.gmra.mrb[0].mxu0 %v859
        %v1073 = vpop.f32.mrb[0].mxu0
        %v1074 = vadd.f32 0.0, %v1073
        %v1075 = vpop.f32.mrb[0].mxu0
        %1076 = vmatprep.mubr.f32.mxu0 0.0
        %1077 = vmatmul.mubr.f32.gmra.mrb[0].mxu0 %v860
        %v1078 = vpop.f32.mrb[0].mxu0
        %v1079 = vadd.f32 0.0, %v1078
        %v1080 = vpop.f32.mrb[0].mxu0
        %1081 = vmatprep.mubr.f32.mxu0 0.0
        %1082 = vmatmul.mubr.f32.gmra.mrb[0].mxu0 %v861
        %v1083 = vpop.f32.mrb[0].mxu0
        %v1084 = vadd.f32 0.0, %v1083
        %v1085 = vpop.f32.mrb[0].mxu0
        %1086 = vmatprep.mubr.f32.mxu0 0.0
        %1087 = vmatmul.mubr.f32.gmra.mrb[0].mxu0 %v862
        %v1088 = vpop.f32.mrb[0].mxu0
        %v1089 = vadd.f32 0.0, %v1088
        %v1090 = vpop.f32.mrb[0].mxu0
        %1091 = vmatprep.mubr.f32.mxu0 0.0
        %1092 = vmatmul.mubr.f32.gmra.mrb[0].mxu0 %v863
        %v1093 = vpop.f32.mrb[0].mxu0
        %v1094 = vadd.f32 0.0, %v1093
        %v1095 = vpop.f32.mrb[0].mxu0
        %1096 = vmatprep.mubr.f32.mxu0 0.0
        %1097 = vmatmul.mubr.f32.gmra.mrb[0].mxu0 %v864
        %v1098 = vpop.f32.mrb[0].mxu0
        %v1099 = vadd.f32 0.0, %v1098
        %v1100 = vpop.f32.mrb[0].mxu0
        %1101 = vmatprep.mubr.f32.mxu0 0.0
        %1102 = vmatmul.mubr.f32.gmra.mrb[0].mxu0 %v865
        %v1103 = vpop.f32.mrb[0].mxu0
        %v1104 = vadd.f32 0.0, %v1103
        %v1105 = vpop.f32.mrb[0].mxu0
        %1106 = vdwg.mxu0
        %1107 = vst [vmem:[%s272] sm:$0xff] %v949
        %1108 = vst [vmem:[%s272 + $0x8] sm:$0xff] %v954
        %1109 = vst [vmem:[%s272 + $0x10] sm:$0xff] %v959
        %1110 = vst [vmem:[%s272 + $0x18] sm:$0xff] %v964
        %1111 = vst [vmem:[%s272 + $0x20] sm:$0xff] %v969
        %1112 = vst [vmem:[%s272 + $0x28] sm:$0xff] %v974
        %1113 = vst [vmem:[%s272 + $0x30] sm:$0xff] %v979
        %1114 = vst [vmem:[%s272 + $0x38] sm:$0xff] %v984
        %1115 = vst [vmem:[%s272 + $0x40] sm:$0xff] %v989
        %1116 = vst [vmem:[%s272 + $0x48] sm:$0xff] %v994
        %1117 = vst [vmem:[%s272 + $0x50] sm:$0xff] %v999
        %1118 = vst [vmem:[%s272 + $0x58] sm:$0xff] %v1004
        %1119 = vst [vmem:[%s272 + $0x60] sm:$0xff] %v1009
        %1120 = vst [vmem:[%s272 + $0x68] sm:$0xff] %v1014
        %1121 = vst [vmem:[%s272 + $0x70] sm:$0xff] %v1019
        %1122 = vst [vmem:[%s272 + $0x78] sm:$0xff] %v1024
        %1123 = vst [vmem:[%s272 + $0x80] sm:$0xff] %v1029
        %1124 = vst [vmem:[%s272 + $0x88] sm:$0xff] %v1034
        %1125 = vst [vmem:[%s272 + $0x90] sm:$0xff] %v1039
        %1126 = vst [vmem:[%s272 + $0x98] sm:$0xff] %v1044
        %1127 = vst [vmem:[%s272 + $0xa0] sm:$0xff] %v1049
        %1128 = vst [vmem:[%s272 + $0xa8] sm:$0xff] %v1054
        %1129 = vst [vmem:[%s272 + $0xb0] sm:$0xff] %v1059
        %1130 = vst [vmem:[%s272 + $0xb8] sm:$0xff] %v1064
        %1131 = vst [vmem:[%s272 + $0xc0] sm:$0xff] %v1069
        %1132 = vst [vmem:[%s272 + $0xc8] sm:$0xff] %v1074
        %1133 = vst [vmem:[%s272 + $0xd0] sm:$0xff] %v1079
        %1134 = vst [vmem:[%s272 + $0xd8] sm:$0xff] %v1084
        %1135 = vst [vmem:[%s272 + $0xe0] sm:$0xff] %v1089
        %1136 = vst [vmem:[%s272 + $0xe8] sm:$0xff] %v1094
        %1137 = vst [vmem:[%s272 + $0xf0] sm:$0xff] %v1099
        %1138 = vst [vmem:[%s272 + $0xf8] sm:$0xff] %v1104
        %s1139 = smul.u32 32, %s20
        %p1140 = scmp.lt.s32.totalorder %s1139, 63
        %s1141 = scalar_select %p1140, %s1139, 63
        %s1142 = smul.addr %s1141, 8
        %s1143 = scalar_lea.vmem %s6, %s1142
        // Predicated region
        $region49: #{mlp_forward.1} parent=43 // pred_check
          %p1144 = pneg %p169
        $region50: #{mlp_forward.1} parent=43 // pred_check_branch
          %1146 = sbr.rel (%p1144) target = $region52
        $region51: #{mlp_forward.1} parent=43 // pred_region
          %s1147 = smul.u32 32, %s20
        $region52: #{mlp_forward.1} parent=43 // pred_fallthru
          _
      $region44: #{mlp_forward.1} parent=5 // pred_fallthru
        _
      %p1148 = scmp.le.s32.totalorder 2, %s15
      // Predicated region
      $region53: #{mlp_forward.1} parent=5 // pred_check
        %p1149 = pneg %p1148
      $region54: #{mlp_forward.1} parent=5 // pred_check_branch
        %1151 = sbr.rel (%p1149) target = $region56
      $region55: #{mlp_forward.1} parent=5 // pred_region
        %s1152 = ssub.s32 %s15, 2
        // Predicated region
        $region57: #{mlp_forward.1} parent=55 // pred_check
          %p1153 = pneg %p175
        $region58: #{mlp_forward.1} parent=55 // pred_check_branch
          %1155 = sbr.rel (%p1153) target = $region60
        $region59: #{mlp_forward.1} parent=55 // pred_region
          %s1156 = smul.u32 32, %s21
          %p1157 = scmp.lt.s32.totalorder %s1156, 63
          %s1158 = scalar_select %p1157, %s1156, 63
          %s1159 = smul.addr %s1158, 8
          %s1160 = scalar_lea.vmem %s6, %s1159
        $region60: #{mlp_forward.1} parent=55 // pred_fallthru
          _
      $region56: #{mlp_forward.1} parent=5 // pred_fallthru
        _
    $region6: #{mlp_forward.1} parent=1 // loop_footer
      %s19 = sadd.s32 1, %s15
    $region7: #{mlp_forward.1} parent=1 // loop_footer_branch
      %14 = sbr.rel target = $region3
    $region8: #{mlp_forward.1} parent=1 // loop_exit
      _
    %1161 = vsyncpa [#allocation3], 1
    %s1162 = scalar_lea.sflag [#allocation3], 1
    %1163 = vsyncpa %s1162, 1

</llo_original>
